<compile_context>
chip_gen: v7x
topology: tpu7x:2x2x1
jax: 0.10.0
libtpu: 0.0.40
codegen_flags: <defaults>
</compile_context>

<pallas_src>
import functools
import math

import jax
import jax.numpy as jnp
from jax.experimental import pallas as pl
from jax.experimental.pallas import tpu as pltpu

_MIB = 1024 * 1024


def _cdiv(a: int, b: int) -> int:
    return (a + b - 1) // b


def _round_up(n: int, m: int) -> int:
    return _cdiv(n, m) * m


def _sublane_multiple(dtype) -> int:
    # f32 packs 8 rows per vreg, bf16 16, int8/fp8 32.
    return max(8, 32 // jnp.dtype(dtype).itemsize)


def _vmem_budget_bytes() -> int:
    # Keep ~1/4 of physical VMEM as compiler headroom:
    #   v7x (64 MiB)      -> ~48 MiB usable budget
    #   v5e/v6e (128 MiB) -> ~96 MiB usable budget
    try:
        cap = int(pltpu.get_tpu_info().vmem_capacity_bytes)
    except Exception:  # conservative fallback if the query is unavailable
        cap = 64 * _MIB
    return (cap * 3) // 4


def _lora_kernel(x_ref, a_ref, b_ref, o_ref, acc_ref, *, alpha):
    """One (TILE_M, TILE_K) step of  out = alpha * (x @ A) @ B."""
    k = pl.program_id(1)

    @pl.when(k == 0)
    def _init():
        acc_ref[...] = jnp.zeros_like(acc_ref)

    # (TILE_M, TILE_K) @ (TILE_K, rank) -> f32 MXU accumulation.
    acc_ref[...] += jnp.dot(x_ref[...], a_ref[...],
                            preferred_element_type=jnp.float32)

    @pl.when(k == pl.num_programs(1) - 1)
    def _finalize():
        # alpha on the tiny (TILE_M, rank) intermediate; keep it f32 so the
        # chained accumulation is not down-cast before the second matmul.
        xa = alpha * acc_ref[...]
        out = jnp.dot(xa, b_ref[...].astype(jnp.float32),
                      preferred_element_type=jnp.float32)
        o_ref[...] = out.astype(o_ref.dtype)


def _select_tiles(M, fan_in, fan_out_p, rank, x_it, a_it, b_it, o_it,
                  sub, budget, tile_m_cap):
    """Pick (TILE_M, TILE_K) that fit the VMEM budget."""
    overhead = 4 * _MIB                   # compiler-internal scratch headroom
    rank_lane = _round_up(rank, 128)      # lane padding of the rank dim

    def max_tile_m(tile_k, a_bufs):
        fixed = (overhead
                 + a_bufs * _round_up(tile_k, 8) * rank_lane * a_it   # A
                 + _round_up(rank, 8) * fan_out_p * b_it)             # B (x1)
        per_row = (2 * tile_k * x_it          # x tile, double-buffered
                   + 2 * fan_out_p * o_it     # out tile, double-buffered
                   + rank_lane * 4)           # f32 accumulator scratch
        return max((budget - fixed) // per_row, 0)

    target_m = min(tile_m_cap, _round_up(M, sub))

    # Prefer the whole fan_in resident (single K step, A single-buffered).
    tile_k, a_bufs = fan_in, 1
    if max_tile_m(fan_in, 1) < target_m and fan_in > 128:
        # Tile the reduction axis; A then changes per step -> double-buffered.
        a_bufs = 2
        tile_k = _round_up(fan_in, 128)
        while tile_k > 128 and max_tile_m(tile_k, a_bufs) < target_m:
            tile_k = max(128, _round_up(tile_k // 2, 128))

    tile_m = min(max_tile_m(tile_k, a_bufs), target_m)
    tile_m = max(sub, (tile_m // sub) * sub)
    return tile_m, tile_k


def lora_forward(x, A, B, alpha, *, tile_m_cap=None):
    """alpha * (x @ A @ B), computed in a single Pallas TPU kernel."""
    fan_in, rank = A.shape
    rank_b, fan_out = B.shape
    assert rank == rank_b and x.shape[-1] == fan_in

    lead_shape = x.shape[:-1]
    M = math.prod(lead_shape) if lead_shape else 1
    x2d = x.reshape(M, fan_in)

    out_dtype = x.dtype
    x_it = jnp.dtype(x.dtype).itemsize
    a_it = jnp.dtype(A.dtype).itemsize
    b_it = jnp.dtype(B.dtype).itemsize
    o_it = jnp.dtype(out_dtype).itemsize
    sub = _sublane_multiple(x.dtype)

    budget = _vmem_budget_bytes()
    if tile_m_cap is None:
        # 512-row tiles hit ~85% of the HBM roofline; allow 1024 only where
        # VMEM is plentiful (v5e/v6e) -- never carry 1024 to v7x's 64 MiB.
        tile_m_cap = 1024 if budget > 64 * _MIB else 512

    # Lane-dense output: pad fan_out to a multiple of 128 so stores are
    # unmasked full-width vst; padding is sliced off after the kernel.
    fan_out_p = _round_up(fan_out, 128)
    B_p = B if fan_out_p == fan_out else jnp.pad(
        B, ((0, 0), (0, fan_out_p - fan_out)))

    tile_m, tile_k = _select_tiles(M, fan_in, fan_out_p, rank,
                                   x_it, a_it, b_it, o_it,
                                   sub, budget, tile_m_cap)

    # If the reduction dim is tiled, zero-pad it so every K block is fully
    # in-bounds (an out-of-range K block would feed garbage into the sum).
    fan_in_p = fan_in if tile_k >= fan_in else _round_up(fan_in, tile_k)
    A_p = A
    if fan_in_p != fan_in:
        x2d = jnp.pad(x2d, ((0, 0), (0, fan_in_p - fan_in)))
        A_p = jnp.pad(A, ((0, fan_in_p - fan_in), (0, 0)))
    tile_k = min(tile_k, fan_in_p)
    grid_k = _cdiv(fan_in_p, tile_k)

    # Keep both v7x TensorCores busy: at least 2 row tiles (and nudge the
    # grid even) whenever M allows it.
    grid_m = _cdiv(M, tile_m)
    if M > sub:
        if grid_m == 1:
            tile_m = _round_up(_cdiv(M, 2), sub)
            grid_m = _cdiv(M, tile_m)
        elif grid_m % 2 == 1:
            tm_even = _round_up(_cdiv(M, grid_m + 1), sub)
            if tm_even >= sub and _cdiv(M, tm_even) % 2 == 0:
                tile_m, grid_m = tm_even, _cdiv(M, tm_even)

    # Derived scoped-VMEM need with headroom -- never the full physical VMEM.
    a_bufs = 1 if grid_k == 1 else 2
    rank_lane = _round_up(rank, 128)
    need = (2 * tile_m * tile_k * x_it
            + 2 * tile_m * fan_out_p * o_it
            + a_bufs * _round_up(tile_k, 8) * rank_lane * a_it
            + _round_up(rank, 8) * fan_out_p * b_it
            + tile_m * rank_lane * 4
            + 4 * _MIB)
    vmem_limit = int(min(budget, max(32 * _MIB, _round_up(need, _MIB))))

    cost = pl.CostEstimate(
        flops=2 * M * rank * (fan_in + fan_out),
        transcendentals=0,
        bytes_accessed=(M * fan_in * x_it
                        + fan_in * rank * a_it
                        + rank * fan_out * b_it
                        + M * fan_out * o_it),
    )

    def build(buffered_ab: bool):
        def spec(shape, index_map, single):
            if single and buffered_ab:
                # Constant index_map -> second pipeline buffer is pure waste.
                return pl.BlockSpec(shape, index_map,
                                    pipeline_mode=pl.Buffered(1))
            return pl.BlockSpec(shape, index_map)

        return pl.pallas_call(
            functools.partial(_lora_kernel, alpha=float(alpha)),
            out_shape=jax.ShapeDtypeStruct((M, fan_out_p), out_dtype),
            grid_spec=pltpu.PrefetchScalarGridSpec(
                num_scalar_prefetch=0,
                grid=(grid_m, grid_k),
                in_specs=[
                    # x row/K tile: double-buffered by the pipeline.
                    pl.BlockSpec((tile_m, tile_k), lambda i, k: (i, k)),
                    # A: resident; single-buffered when its index is constant.
                    spec((tile_k, rank), lambda i, k: (k, 0), grid_k == 1),
                    # B: constant across the whole grid -> single buffer.
                    spec((rank, fan_out_p), lambda i, k: (0, 0), True),
                ],
                out_specs=pl.BlockSpec((tile_m, fan_out_p),
                                       lambda i, k: (i, 0)),
                scratch_shapes=[pltpu.VMEM((tile_m, rank), jnp.float32)],
            ),
            compiler_params=pltpu.CompilerParams(
                dimension_semantics=("parallel", "arbitrary"),
                vmem_limit_bytes=vmem_limit,
            ),
            cost_estimate=cost,
        )

    try:
        out2d = build(buffered_ab=True)(x2d, A_p, B_p)
    except Exception:
        # Fallback if this jax version rejects pipeline_mode=pl.Buffered(1):
        # default double-buffered A/B blocks (slightly more VMEM, same math).
        out2d = build(buffered_ab=False)(x2d, A_p, B_p)

    out2d = out2d[:, :fan_out]
    return out2d.reshape(*lead_shape, fan_out)


if __name__ == "__main__":
    # Small shapes consistent with the module: x is (batch, seq, fan_in).
    batch, seq = 2, 8
    fan_in, fan_out, rank, alpha = 32, 32, 4, 8

    key = jax.random.PRNGKey(0)
    kx, ka, kb = jax.random.split(key, 3)

    # PyTorch init: A ~ randn(fan_in, rank) * rank**-0.5, B = zeros.  A nonzero
    # B is used here so the numerical check is meaningful; the zero-B init is
    # verified separately below.
    std = float(rank) ** -0.5
    A = jax.random.normal(ka, (fan_in, rank), dtype=jnp.float32) * std
    B = jax.random.normal(kb, (rank, fan_out), dtype=jnp.float32) * 0.1
    x = jax.random.normal(kx, (batch, seq, fan_in), dtype=jnp.float32)

    out = lora_forward(x, A, B, alpha)
    out = jax.block_until_ready(out)

    # Reference in full f32 precision (kernel accumulates in f32 on the MXU).
    hi = jax.lax.Precision.HIGHEST
    ref = alpha * jnp.matmul(jnp.matmul(x, A, precision=hi), B, precision=hi)
    assert out.shape == (batch, seq, fan_out)
    assert jnp.allclose(out, ref, atol=2e-4, rtol=2e-4), float(
        jnp.max(jnp.abs(out - ref)))

    # Module's actual init (B == 0) -> output must be exactly zero.
    out0 = jax.block_until_ready(
        lora_forward(x, A, jnp.zeros((rank, fan_out), jnp.float32), alpha))
    assert jnp.allclose(out0, 0.0)

    print("KERNEL_OK")
</pallas_src>

<mosaic_0001>
module attributes {stable_mosaic.version = 11 : i64} {
  func.func @_lora_kernel(%arg0: i32, %arg1: i32, %arg2: memref<8x32xf32, #tpu.memory_space<vmem>>, %arg3: memref<32x4xf32, #tpu.memory_space<vmem>>, %arg4: memref<4x128xf32, #tpu.memory_space<vmem>>, %arg5: memref<8x128xf32, #tpu.memory_space<vmem>>, %arg6: memref<8x4xf32, #tpu.memory_space<vmem>>) attributes {dimension_semantics = [#tpu.dimension_semantics<parallel>, #tpu.dimension_semantics<arbitrary>], iteration_bounds = array<i64: 2, 1>, scalar_prefetch = 0 : i64, scratch_operands = 1 : i64, tpu.core_type = #tpu.core_type<tc>, window_params = [{transform_indices = @transform_0, window_bounds = array<i64: 8, 32>}, {pipeline_mode = #tpu.pipeline_mode<synchronous>, transform_indices = @transform_1, window_bounds = array<i64: 32, 4>}, {pipeline_mode = #tpu.pipeline_mode<synchronous>, transform_indices = @transform_2, window_bounds = array<i64: 4, 128>}, {transform_indices = @transform_3, window_bounds = array<i64: 8, 128>}]} {
    %c0_i32 = arith.constant 0 : i32
    %0 = arith.cmpi eq, %arg1, %c0_i32 : i32
    %1 = arith.extui %0 : i1 to i32
    %c0_i32_0 = arith.constant 0 : i32
    %2 = arith.cmpi ne, %1, %c0_i32_0 : i32
    scf.if %2 {
      %cst_10 = arith.constant 0.000000e+00 : f32
      %12 = vector.broadcast %cst_10 : f32 to vector<8x4xf32>
      %c0_11 = arith.constant 0 : index
      %c0_12 = arith.constant 0 : index
      %13 = vector.load %arg6[%c0_11, %c0_12] : memref<8x4xf32, #tpu.memory_space<vmem>>, vector<8x4xf32>
      tpu.vector_store %arg6[%c0_11, %c0_12], %12 {strides = array<i32>} : memref<8x4xf32, #tpu.memory_space<vmem>>, vector<8x4xf32>,
    } else {
    }
    %c0 = arith.constant 0 : index
    %c0_1 = arith.constant 0 : index
    %3 = vector.load %arg6[%c0, %c0_1] : memref<8x4xf32, #tpu.memory_space<vmem>>, vector<8x4xf32>
    %c0_2 = arith.constant 0 : index
    %c0_3 = arith.constant 0 : index
    %4 = vector.load %arg2[%c0_2, %c0_3] : memref<8x32xf32, #tpu.memory_space<vmem>>, vector<8x32xf32>
    %c0_4 = arith.constant 0 : index
    %c0_5 = arith.constant 0 : index
    %5 = vector.load %arg3[%c0_4, %c0_5] : memref<32x4xf32, #tpu.memory_space<vmem>>, vector<32x4xf32>
    %cst = arith.constant dense<0.000000e+00> : vector<8x4xf32>
    %6 = tpu.matmul %4, %5, %cst {dimension_numbers = #tpu.dot_dimension_numbers<[1], [0], [0], [1], [0, 0, 1, 1], [], []>} : vector<8x32xf32>, vector<32x4xf32>, vector<8x4xf32> -> vector<8x4xf32>
    %7 = arith.addf %3, %6 : vector<8x4xf32>
    %c0_6 = arith.constant 0 : index
    %c0_7 = arith.constant 0 : index
    %8 = vector.load %arg6[%c0_6, %c0_7] : memref<8x4xf32, #tpu.memory_space<vmem>>, vector<8x4xf32>
    tpu.vector_store %arg6[%c0_6, %c0_7], %7 {strides = array<i32>} : memref<8x4xf32, #tpu.memory_space<vmem>>, vector<8x4xf32>,
    %c0_i32_8 = arith.constant 0 : i32
    %9 = arith.cmpi eq, %arg1, %c0_i32_8 : i32
    %10 = arith.extui %9 : i1 to i32
    %c0_i32_9 = arith.constant 0 : i32
    %11 = arith.cmpi ne, %10, %c0_i32_9 : i32
    scf.if %11 {
      %c0_10 = arith.constant 0 : index
      %c0_11 = arith.constant 0 : index
      %12 = vector.load %arg6[%c0_10, %c0_11] : memref<8x4xf32, #tpu.memory_space<vmem>>, vector<8x4xf32>
      %cst_12 = arith.constant 8.000000e+00 : f32
      %13 = vector.broadcast %cst_12 : f32 to vector<8x4xf32>
      %14 = arith.mulf %13, %12 : vector<8x4xf32>
      %c0_13 = arith.constant 0 : index
      %c0_14 = arith.constant 0 : index
      %15 = vector.load %arg4[%c0_13, %c0_14] : memref<4x128xf32, #tpu.memory_space<vmem>>, vector<4x128xf32>
      %cst_15 = arith.constant dense<0.000000e+00> : vector<8x128xf32>
      %16 = tpu.matmul %14, %15, %cst_15 {dimension_numbers = #tpu.dot_dimension_numbers<[1], [0], [0], [1], [0, 0, 1, 1], [], []>} : vector<8x4xf32>, vector<4x128xf32>, vector<8x128xf32> -> vector<8x128xf32>
      %c0_16 = arith.constant 0 : index
      %c0_17 = arith.constant 0 : index
      %17 = vector.load %arg5[%c0_16, %c0_17] : memref<8x128xf32, #tpu.memory_space<vmem>>, vector<8x128xf32>
      tpu.vector_store %arg5[%c0_16, %c0_17], %16 {strides = array<i32>} : memref<8x128xf32, #tpu.memory_space<vmem>>, vector<8x128xf32>,
    } else {
    }
    return
  }
  func.func @transform_0(%arg0: i32, %arg1: i32) -> (i32, i32) {
    %c0_i32 = arith.constant 0 : i32
    return %arg0, %arg1 : i32, i32
  }
  func.func @transform_1(%arg0: i32, %arg1: i32) -> (i32, i32) {
    %c0_i32 = arith.constant 0 : i32
    %c0_i32_0 = arith.constant 0 : i32
    return %arg1, %c0_i32 : i32, i32
  }
  func.func @transform_2(%arg0: i32, %arg1: i32) -> (i32, i32) {
    %c0_i32 = arith.constant 0 : i32
    %c0_i32_0 = arith.constant 0 : i32
    %c0_i32_1 = arith.constant 0 : i32
    return %c0_i32, %c0_i32_0 : i32, i32
  }
  func.func @transform_3(%arg0: i32, %arg1: i32) -> (i32, i32) {
    %c0_i32 = arith.constant 0 : i32
    %c0_i32_0 = arith.constant 0 : i32
    return %arg0, %c0_i32 : i32, i32
  }
}

module attributes {stable_mosaic.version = 11 : i64} {
  func.func @_lora_kernel(%arg0: i32, %arg1: i32, %arg2: memref<8x32xf32, #tpu.memory_space<vmem>>, %arg3: memref<32x4xf32, #tpu.memory_space<vmem>>, %arg4: memref<4x128xf32, #tpu.memory_space<vmem>>, %arg5: memref<8x128xf32, #tpu.memory_space<vmem>>, %arg6: memref<8x4xf32, #tpu.memory_space<vmem>>) attributes {dimension_semantics = [#tpu.dimension_semantics<parallel>, #tpu.dimension_semantics<arbitrary>], iteration_bounds = array<i64: 2, 1>, scalar_prefetch = 0 : i64, scratch_operands = 1 : i64, tpu.core_type = #tpu.core_type<tc>, window_params = [{transform_indices = @transform_0, window_bounds = array<i64: 8, 32>}, {transform_indices = @transform_1, window_bounds = array<i64: 32, 4>}, {pipeline_mode = #tpu.pipeline_mode<synchronous>, transform_indices = @transform_2, window_bounds = array<i64: 4, 128>}, {transform_indices = @transform_3, window_bounds = array<i64: 8, 128>}]} {
    %c0_i32 = arith.constant 0 : i32
    %0 = arith.cmpi eq, %arg1, %c0_i32 : i32
    %1 = arith.extui %0 : i1 to i32
    %c0_i32_0 = arith.constant 0 : i32
    %2 = arith.cmpi ne, %1, %c0_i32_0 : i32
    scf.if %2 {
      %cst_10 = arith.constant 0.000000e+00 : f32
      %12 = vector.broadcast %cst_10 : f32 to vector<8x4xf32>
      %c0_11 = arith.constant 0 : index
      %c0_12 = arith.constant 0 : index
      %13 = vector.load %arg6[%c0_11, %c0_12] : memref<8x4xf32, #tpu.memory_space<vmem>>, vector<8x4xf32>
      tpu.vector_store %arg6[%c0_11, %c0_12], %12 {strides = array<i32>} : memref<8x4xf32, #tpu.memory_space<vmem>>, vector<8x4xf32>,
    } else {
    }
    %c0 = arith.constant 0 : index
    %c0_1 = arith.constant 0 : index
    %3 = vector.load %arg6[%c0, %c0_1] : memref<8x4xf32, #tpu.memory_space<vmem>>, vector<8x4xf32>
    %c0_2 = arith.constant 0 : index
    %c0_3 = arith.constant 0 : index
    %4 = vector.load %arg2[%c0_2, %c0_3] : memref<8x32xf32, #tpu.memory_space<vmem>>, vector<8x32xf32>
    %c0_4 = arith.constant 0 : index
    %c0_5 = arith.constant 0 : index
    %5 = vector.load %arg3[%c0_4, %c0_5] : memref<32x4xf32, #tpu.memory_space<vmem>>, vector<32x4xf32>
    %cst = arith.constant dense<0.000000e+00> : vector<8x4xf32>
    %6 = tpu.matmul %4, %5, %cst {dimension_numbers = #tpu.dot_dimension_numbers<[1], [0], [0], [1], [0, 0, 1, 1], [], []>} : vector<8x32xf32>, vector<32x4xf32>, vector<8x4xf32> -> vector<8x4xf32>
    %7 = arith.addf %3, %6 : vector<8x4xf32>
    %c0_6 = arith.constant 0 : index
    %c0_7 = arith.constant 0 : index
    %8 = vector.load %arg6[%c0_6, %c0_7] : memref<8x4xf32, #tpu.memory_space<vmem>>, vector<8x4xf32>
    tpu.vector_store %arg6[%c0_6, %c0_7], %7 {strides = array<i32>} : memref<8x4xf32, #tpu.memory_space<vmem>>, vector<8x4xf32>,
    %c0_i32_8 = arith.constant 0 : i32
    %9 = arith.cmpi eq, %arg1, %c0_i32_8 : i32
    %10 = arith.extui %9 : i1 to i32
    %c0_i32_9 = arith.constant 0 : i32
    %11 = arith.cmpi ne, %10, %c0_i32_9 : i32
    scf.if %11 {
      %c0_10 = arith.constant 0 : index
      %c0_11 = arith.constant 0 : index
      %12 = vector.load %arg6[%c0_10, %c0_11] : memref<8x4xf32, #tpu.memory_space<vmem>>, vector<8x4xf32>
      %cst_12 = arith.constant 8.000000e+00 : f32
      %13 = vector.broadcast %cst_12 : f32 to vector<8x4xf32>
      %14 = arith.mulf %13, %12 : vector<8x4xf32>
      %c0_13 = arith.constant 0 : index
      %c0_14 = arith.constant 0 : index
      %15 = vector.load %arg4[%c0_13, %c0_14] : memref<4x128xf32, #tpu.memory_space<vmem>>, vector<4x128xf32>
      %cst_15 = arith.constant dense<0.000000e+00> : vector<8x128xf32>
      %16 = tpu.matmul %14, %15, %cst_15 {dimension_numbers = #tpu.dot_dimension_numbers<[1], [0], [0], [1], [0, 0, 1, 1], [], []>} : vector<8x4xf32>, vector<4x128xf32>, vector<8x128xf32> -> vector<8x128xf32>
      %c0_16 = arith.constant 0 : index
      %c0_17 = arith.constant 0 : index
      %17 = vector.load %arg5[%c0_16, %c0_17] : memref<8x128xf32, #tpu.memory_space<vmem>>, vector<8x128xf32>
      tpu.vector_store %arg5[%c0_16, %c0_17], %16 {strides = array<i32>} : memref<8x128xf32, #tpu.memory_space<vmem>>, vector<8x128xf32>,
    } else {
    }
    return
  }
  func.func @transform_0(%arg0: i32, %arg1: i32) -> (i32, i32) {
    %c0_i32 = arith.constant 0 : i32
    return %arg0, %arg1 : i32, i32
  }
  func.func @transform_1(%arg0: i32, %arg1: i32) -> (i32, i32) {
    %c0_i32 = arith.constant 0 : i32
    %c0_i32_0 = arith.constant 0 : i32
    return %arg1, %c0_i32 : i32, i32
  }
  func.func @transform_2(%arg0: i32, %arg1: i32) -> (i32, i32) {
    %c0_i32 = arith.constant 0 : i32
    %c0_i32_0 = arith.constant 0 : i32
    %c0_i32_1 = arith.constant 0 : i32
    return %c0_i32, %c0_i32_0 : i32, i32
  }
  func.func @transform_3(%arg0: i32, %arg1: i32) -> (i32, i32) {
    %c0_i32 = arith.constant 0 : i32
    %c0_i32_0 = arith.constant 0 : i32
    return %arg0, %c0_i32 : i32, i32
  }
}

</mosaic_0001>

<llo_original>
// kernel: tpu_custom_call.1
$region0: #{tpu_custom_call.1}
  #allocation0 [shape = 'u32[]', space=smem, size = 0x4, offset = 0x4, fixed_abs, tag = 'smem constant byte address 0x4 - core index']
  #allocation1 [shape = 'u32[144,128]{1,0:T(1,128)}', space=vmem, size = 0x12000, scoped, tag = 'internal scratch']
  #allocation2 [shape = 'f32[8,4]{1,0:T(8,128)}', space=vmem, size = 0x1000, scoped, tag = 'scratch operand']
  %s0 = inlined_call_operand.vmem [shape: f32[16,32], index: 0, kind: input, shape index: {}]
  %s1 = inlined_call_operand.vmem [shape: f32[32,4], index: 1, kind: input, shape index: {}]
  %s2 = inlined_call_operand.vmem [shape: f32[4,128], index: 2, kind: input, shape index: {}]
  %s3 = inlined_call_operand.hbm [shape: f32[16,128], index: 3, kind: output, shape index: {}]
  %s4 = sld [smem:[#allocation0]]
  $region53: #{tpu_custom_call.1} parent=0
    _
  %s6 = ssub.s32 1, %s4
  %s7 = scalar_select 0, %s6, %s4
  $region1: #{tpu_custom_call.1} parent=0
    #allocation3 [shape = 'u8[8192]{0}', space=vmem, size = 0x2000, scoped, tag = 'output window, operand 0']
    #allocation4 [shape = 's32[2]{0}', space=sflag, size = 0x8, scoped, tag = 'scoped memory for tpu_custom_call.1']
    %8 = vsyncpa [#allocation4], 0
    %s9 = scalar_lea.sflag [#allocation4], 1
    %10 = vsyncpa %s9, 0
    loop: start=0, step=1, limit=4
    $region2: #{tpu_custom_call.1} parent=1 // loop_pre_header
      _
    $region3: #{tpu_custom_call.1} parent=1 // loop_header
      %s12 = sphi 0, %s16
      %p13 = scmp.ge.s32.totalorder %s12, 4
      %s19 = sphi 0, %s31
      %s20 = sphi 0, %s27
      %s21 = sphi 0, %s19
      %s22 = sphi 0, %s20
      %s23 = sphi 0, %s21
      %s24 = sphi 0, %s22
      %s36 = sphi 0, %s38
      %s39 = sphi 0, %s36
      %s40 = sphi 0, %s39
      %s56 = sphi 0, %s40
      %s62 = sphi 0, %s64
      %s65 = sphi 0, %s62
      %s66 = sphi 0, %s65
      %s82 = sphi 0, %s66
      %s86 = sphi 0, %s86
      %s88 = sphi 0, %s86
      %s89 = sphi 0, %s88
      %s103 = sphi 0, %s89
      %s109 = sphi 0, %s111
      %s112 = sphi 0, %s109
      %s113 = sphi 0, %s112
      %s129 = sphi 0, %s113
    $region4: #{tpu_custom_call.1} parent=1 // loop_header_branch
      %15 = sbr.rel (%p13) target = $region8
    $region5: #{tpu_custom_call.1} parent=1 // loop_body
      %s17 = ssub.s32 %s12, 1
      %s18 = ssub.s32 %s12, 2
      %s25 = sadd.s32 1, %s20
      %p26 = scmp.ge.s32.totalorder %s25, 1
      %s27 = scalar_select %p26, 0, %s25
      %s28 = sadd.s32 1, %s19
      %s29 = scalar_select %p26, %s28, %s19
      %p30 = scmp.ge.s32.totalorder %s29, 2
      %s31 = scalar_select %p30, 0, %s29
      %s32 = ssub.s32 %s19, %s31
      %s33 = ssub.s32 %s20, %s27
      %s34 = sor.u32 %s32, %s33
      %p35 = scmp.eq.s32.totalorder %s34, 0
      %s37 = sadd.s32 %s36, 1
      %s38 = scalar_select %p35, %s36, %s37
      %p41 = pneg %p35
      %p42 = scmp.eq.s32.totalorder %s12, 1
      %p43 = por %p41, %p42
      %p44 = scmp.ne.s32.totalorder %s36, %s39
      %p45 = scmp.eq.s32.totalorder %s12, 0
      %p46 = por %p44, %p45
      %p47 = scmp.ne.s32.totalorder %s36, %s39
      %p48 = scmp.eq.s32.totalorder %s17, 1
      %p49 = por %p47, %p48
      %p50 = scmp.ne.s32.totalorder %s39, %s40
      %p51 = scmp.eq.s32.totalorder %s17, 0
      %p52 = por %p50, %p51
      %p53 = scmp.ne.s32.totalorder %s39, %s40
      %p54 = scmp.eq.s32.totalorder %s18, 1
      %p55 = por %p53, %p54
      %p57 = scmp.ne.s32.totalorder %s40, %s56
      %p58 = scmp.eq.s32.totalorder %s18, 0
      %p59 = por %p57, %p58
      %s60 = ssub.s32 %s20, %s27
      %p61 = scmp.eq.s32.totalorder %s60, 0
      %s63 = sadd.s32 %s62, 1
      %s64 = scalar_select %p61, %s62, %s63
      %p67 = pneg %p61
      %p68 = scmp.eq.s32.totalorder %s12, 1
      %p69 = por %p67, %p68
      %p70 = scmp.ne.s32.totalorder %s62, %s65
      %p71 = scmp.eq.s32.totalorder %s12, 0
      %p72 = por %p70, %p71
      %p73 = scmp.ne.s32.totalorder %s62, %s65
      %p74 = scmp.eq.s32.totalorder %s17, 1
      %p75 = por %p73, %p74
      %p76 = scmp.ne.s32.totalorder %s65, %s66
      %p77 = scmp.eq.s32.totalorder %s17, 0
      %p78 = por %p76, %p77
      %p79 = scmp.ne.s32.totalorder %s65, %s66
      %p80 = scmp.eq.s32.totalorder %s18, 1
      %p81 = por %p79, %p80
      %p83 = scmp.ne.s32.totalorder %s66, %s82
      %p84 = scmp.eq.s32.totalorder %s18, 0
      %p85 = por %p83, %p84
      %s87 = sadd.s32 %s86, 1
      %p90 = scmp.eq.s32.totalorder %s12, 1
      %p91 = scmp.ne.s32.totalorder %s86, %s88
      %p92 = scmp.eq.s32.totalorder %s12, 0
      %p93 = por %p91, %p92
      %p94 = scmp.ne.s32.totalorder %s86, %s88
      %p95 = scmp.eq.s32.totalorder %s17, 1
      %p96 = por %p94, %p95
      %p97 = scmp.ne.s32.totalorder %s88, %s89
      %p98 = scmp.eq.s32.totalorder %s17, 0
      %p99 = por %p97, %p98
      %p100 = scmp.ne.s32.totalorder %s88, %s89
      %p101 = scmp.eq.s32.totalorder %s18, 1
      %p102 = por %p100, %p101
      %p104 = scmp.ne.s32.totalorder %s89, %s103
      %p105 = scmp.eq.s32.totalorder %s18, 0
      %p106 = por %p104, %p105
      %s107 = ssub.s32 %s19, %s31
      %p108 = scmp.eq.s32.totalorder %s107, 0
      %s110 = sadd.s32 %s109, 1
      %s111 = scalar_select %p108, %s109, %s110
      %p114 = pneg %p108
      %p115 = scmp.eq.s32.totalorder %s12, 1
      %p116 = por %p114, %p115
      %p117 = scmp.ne.s32.totalorder %s109, %s112
      %p118 = scmp.eq.s32.totalorder %s12, 0
      %p119 = por %p117, %p118
      %p120 = scmp.ne.s32.totalorder %s109, %s112
      %p121 = scmp.eq.s32.totalorder %s17, 1
      %p122 = por %p120, %p121
      %p123 = scmp.ne.s32.totalorder %s112, %s113
      %p124 = scmp.eq.s32.totalorder %s17, 0
      %p125 = por %p123, %p124
      %p126 = scmp.ne.s32.totalorder %s112, %s113
      %p127 = scmp.eq.s32.totalorder %s18, 1
      %p128 = por %p126, %p127
      %p130 = scmp.ne.s32.totalorder %s113, %s129
      %p131 = scmp.eq.s32.totalorder %s18, 0
      %p132 = por %p130, %p131
      %p133 = scmp.le.s32.totalorder 1, %s12
      %p134 = scmp.lt.s32.totalorder %s12, 3
      %p135 = pnand %p133, %p134
      %p136 = pneg %p135
      // Predicated region
      $region9: #{tpu_custom_call.1} parent=5 // pred_check
        _
      $region10: #{tpu_custom_call.1} parent=5 // pred_check_branch
        %138 = sbr.rel (%p135) target = $region12
      $region11: #{tpu_custom_call.1} parent=5 // pred_region
        %s139 = ssub.s32 %s12, 1
        // Predicated region
        $region13: #{tpu_custom_call.1} parent=11 // pred_check
          %p140 = pneg %p78
        $region14: #{tpu_custom_call.1} parent=11 // pred_check_branch
          %142 = sbr.rel (%p140) target = $region16
        $region15: #{tpu_custom_call.1} parent=11 // pred_region
          %s143 = smul.u32 4, %s22
          %p144 = scmp.lt.s32.totalorder %s143, 3
          %s145 = scalar_select %p144, %s143, 3
          %s146 = smul.addr %s145, 8
          %s147 = scalar_lea.vmem %s1, %s146
          %s148 = smul.u32 4, %s22
        $region16: #{tpu_custom_call.1} parent=11 // pred_fallthru
          _
        // Predicated region
        $region17: #{tpu_custom_call.1} parent=11 // pred_check
          %p149 = pneg %p99
        $region18: #{tpu_custom_call.1} parent=11 // pred_check_branch
          %151 = sbr.rel (%p149) target = $region20
        $region19: #{tpu_custom_call.1} parent=11 // pred_region
          _
        $region20: #{tpu_custom_call.1} parent=11 // pred_fallthru
          _
      $region12: #{tpu_custom_call.1} parent=5 // pred_fallthru
        _
      %p152 = scmp.lt.s32.totalorder %s12, 2
      // Predicated region
      $region21: #{tpu_custom_call.1} parent=5 // pred_check
        %p153 = pneg %p152
      $region22: #{tpu_custom_call.1} parent=5 // pred_check_branch
        %155 = sbr.rel (%p153) target = $region24
      $region23: #{tpu_custom_call.1} parent=5 // pred_region
        // Predicated region
        $region25: #{tpu_custom_call.1} parent=23 // pred_check
          %p156 = pneg %p46
        $region26: #{tpu_custom_call.1} parent=23 // pred_check_branch
          %158 = sbr.rel (%p156) target = $region28
        $region27: #{tpu_custom_call.1} parent=23 // pred_region
          %p159 = scmp.lt.s32.totalorder %s19, 1
          %s160 = scalar_select %p159, %s19, 1
          %p161 = scmp.lt.s32.totalorder %s20, 0
          %s162 = scalar_select %p161, %s20, 0
          %s163 = sadd.s32 %s162, %s160
          %s164 = smul.addr %s163, 8
          %s165 = scalar_lea.vmem %s0, %s164
        $region28: #{tpu_custom_call.1} parent=23 // pred_fallthru
          _
      $region24: #{tpu_custom_call.1} parent=5 // pred_fallthru
        _
      %p166 = scmp.le.s32.totalorder 1, %s12
      %p167 = scmp.lt.s32.totalorder %s12, 3
      %p168 = pnand %p166, %p167
      %p169 = pneg %p168
      // Predicated region
      $region29: #{tpu_custom_call.1} parent=5 // pred_check
        _
      $region30: #{tpu_custom_call.1} parent=5 // pred_check_branch
        %171 = sbr.rel (%p168) target = $region32
      $region31: #{tpu_custom_call.1} parent=5 // pred_region
        %s172 = ssub.s32 %s12, 1
        %p173 = scmp.lt.s32.totalorder %s21, 1
        %s174 = scalar_select %p173, %s21, 1
        %p175 = scmp.lt.s32.totalorder %s22, 0
        %s176 = scalar_select %p175, %s22, 0
        %s177 = sadd.s32 %s176, %s174
        %s178 = smul.addr %s177, 8
        %s179 = scalar_lea.vmem %s0, %s178
        %p180 = pneg %p52
        %p181 = pneg %p49
        %s182 = smul.u32 4, %s22
        %p183 = scmp.lt.s32.totalorder %s182, 3
        %s184 = scalar_select %p183, %s182, 3
        %s185 = smul.addr %s184, 8
        %s186 = scalar_lea.vmem %s1, %s185
        %p187 = pneg %p78
        %p188 = pneg %p75
        %p189 = pneg %p99
        %p190 = pneg %p96
        %p191 = pneg %p125
        %p192 = pneg %p122
        %s193 = sand.u32 %s112, 1
        %s194 = scalar_lea.sflag [#allocation4], %s193
        %s195 = sand.u32 %s112, 1
        %s196 = smul.addr %s195, 8
        %s197 = scalar_lea.vmem [#allocation3], %s196
        %p198 = scmp.lt.s32.totalorder %s21, 1
        %s199 = scalar_select %p198, %s21, 1
        %p200 = scmp.lt.s32.totalorder %s22, 0
        %s201 = scalar_select %p200, %s22, 0
        %s202 = sadd.s32 %s201, %s199
        %s203 = smul.addr %s202, 8
        %s204 = scalar_lea.vmem %s0, %s203
        %s205 = smul.u32 4, %s22
        %p206 = scmp.lt.s32.totalorder %s205, 3
        %s207 = scalar_select %p206, %s205, 3
        %s208 = smul.addr %s207, 8
        %s209 = scalar_lea.vmem %s1, %s208
        %s210 = smul.u32 4, %s22
        %p211 = scmp.eq.s32.totalorder %s22, 0
        // Predicated region
        $region33: #{tpu_custom_call.1} parent=31 // pred_check
          %p212 = pneg %p211
        $region34: #{tpu_custom_call.1} parent=31 // pred_check_branch
          %214 = sbr.rel (%p212) target = $region36
        $region35: #{tpu_custom_call.1} parent=31 // pred_region
          %vm215 = vcmask 31744
          %216 = vst.msk [vmem:[#allocation2] sm:$0xff] %vm215, 0.0
        $region36: #{tpu_custom_call.1} parent=31 // pred_fallthru
          _
        %v217 = vld [vmem:[#allocation2] sm:$0xff]
        %v218 = vld [vmem:[%s204] sm:$0xff]
        %v219 = vld [vmem:[%s209] sm:$0xff]
        %v220 = vld [vmem:[%s209 + $0x8] sm:$0xff]
        %v221 = vld [vmem:[%s209 + $0x10] sm:$0xff]
        %v222 = vld [vmem:[%s209 + $0x18] sm:$0xff]
        %vm223 = vcmask 261120
        %v225 = vsel %vm223, %v218, 0
        %227 = vmatprep.subr.mxu0 0.0
        %228 = vmatpush1.msra.mxu0 %v219
        %229 = vmatprep.subr.mxu0 0.0
        %230 = vmatpush1.msra.mxu0 %v220
        %231 = vmatprep.subr.mxu0 0.0
        %232 = vmatpush1.msra.mxu0 %v221
        %233 = vmatprep.subr.mxu0 0.0
        %234 = vmatpush1.msra.mxu0 %v222
        %235 = vmatprep.subr.mxu0 0.0
        %236 = vmatpush1.msra.mxu0 0.0
        %237 = vmatprep.subr.mxu0 0.0
        %238 = vmatpush1.msra.mxu0 0.0
        %239 = vmatprep.subr.mxu0 0.0
        %240 = vmatpush1.msra.mxu0 0.0
        %241 = vmatprep.subr.mxu0 0.0
        %242 = vmatpush1.msra.mxu0 0.0
        %243 = vmatprep.subr.mxu0 0.0
        %244 = vmatpush1.msra.mxu0 0.0
        %245 = vmatprep.subr.mxu0 0.0
        %246 = vmatpush1.msra.mxu0 0.0
        %247 = vmatprep.subr.mxu0 0.0
        %248 = vmatpush1.msra.mxu0 0.0
        %249 = vmatprep.subr.mxu0 0.0
        %250 = vmatpush1.msra.mxu0 0.0
        %251 = vmatprep.subr.mxu0 0.0
        %252 = vmatpush1.msra.mxu0 0.0
        %253 = vmatprep.subr.mxu0 0.0
        %254 = vmatpush1.msra.mxu0 0.0
        %255 = vmatprep.subr.mxu0 0.0
        %256 = vmatpush1.msra.mxu0 0.0
        %257 = vmatprep.subr.mxu0 0.0
        %258 = vmatpush1.msra.mxu0 0.0
        %259 = vmatprep.subr.mxu0 0.0
        %260 = vmatpush1.msra.mxu0 0.0
        %261 = vmatprep.subr.mxu0 0.0
        %262 = vmatpush1.msra.mxu0 0.0
        %263 = vmatprep.subr.mxu0 0.0
        %264 = vmatpush1.msra.mxu0 0.0
        %265 = vmatprep.subr.mxu0 0.0
        %266 = vmatpush1.msra.mxu0 0.0
        %267 = vmatprep.subr.mxu0 0.0
        %268 = vmatpush1.msra.mxu0 0.0
        %269 = vmatprep.subr.mxu0 0.0
        %270 = vmatpush1.msra.mxu0 0.0
        %271 = vmatprep.subr.mxu0 0.0
        %272 = vmatpush1.msra.mxu0 0.0
        %273 = vmatprep.subr.mxu0 0.0
        %274 = vmatpush1.msra.mxu0 0.0
        %275 = vmatprep.subr.mxu0 0.0
        %276 = vmatpush1.msra.mxu0 0.0
        %277 = vmatprep.subr.mxu0 0.0
        %278 = vmatpush1.msra.mxu0 0.0
        %279 = vmatprep.subr.mxu0 0.0
        %280 = vmatpush1.msra.mxu0 0.0
        %281 = vmatprep.subr.mxu0 0.0
        %282 = vmatpush1.msra.mxu0 0.0
        %283 = vmatprep.subr.mxu0 0.0
        %284 = vmatpush1.msra.mxu0 0.0
        %285 = vmatprep.subr.mxu0 0.0
        %286 = vmatpush1.msra.mxu0 0.0
        %287 = vmatprep.subr.mxu0 0.0
        %288 = vmatpush1.msra.mxu0 0.0
        %289 = vmatprep.subr.mxu0 0.0
        %290 = vmatpush1.msra.mxu0 0.0
        %291 = vmatprep.mubr.f32.mxu0 0.0
        %292 = vmatmul.mubr.f32.gmra.mrb[0].mxu0 %v225
        %v293 = vpop.f32.mrb[0].mxu0
        %v294 = vadd.f32 0.0, %v293
        %v295 = vpop.f32.mrb[0].mxu0
        %296 = vdwg.mxu0
        %v297 = vadd.f32 %v217, %v294
        %vm298 = vcmask 31744
        %299 = vst.msk [vmem:[#allocation2] sm:$0xff] %vm298, %v297
        // Predicated region
        $region37: #{tpu_custom_call.1} parent=31 // pred_check
          %p300 = pneg %p211
        $region38: #{tpu_custom_call.1} parent=31 // pred_check_branch
          %302 = sbr.rel (%p300) target = $region40
        $region39: #{tpu_custom_call.1} parent=31 // pred_region
          %v303 = vld [vmem:[#allocation2] sm:$0xff]
          %v304 = vmul.f32 %v303, 8.0
          %v305 = vld [vmem:[%s2] sm:$0xf]
          %v307 = vsel %vm298, %v304, 0
          %vm309 = vcmask 1043456
          %v311 = vsel %vm309, %v305, 0
          %313 = vmatprep.subr.mxu0 0.0
          %314 = vmatpush1.msra.mxu0 %v311
          %315 = vmatprep.subr.mxu0 0.0
          %316 = vmatpush1.msra.mxu0 0.0
          %317 = vmatprep.subr.mxu0 0.0
          %318 = vmatpush1.msra.mxu0 0.0
          %319 = vmatprep.subr.mxu0 0.0
          %320 = vmatpush1.msra.mxu0 0.0
          %321 = vmatprep.subr.mxu0 0.0
          %322 = vmatpush1.msra.mxu0 0.0
          %323 = vmatprep.subr.mxu0 0.0
          %324 = vmatpush1.msra.mxu0 0.0
          %325 = vmatprep.subr.mxu0 0.0
          %326 = vmatpush1.msra.mxu0 0.0
          %327 = vmatprep.subr.mxu0 0.0
          %328 = vmatpush1.msra.mxu0 0.0
          %329 = vmatprep.subr.mxu0 0.0
          %330 = vmatpush1.msra.mxu0 0.0
          %331 = vmatprep.subr.mxu0 0.0
          %332 = vmatpush1.msra.mxu0 0.0
          %333 = vmatprep.subr.mxu0 0.0
          %334 = vmatpush1.msra.mxu0 0.0
          %335 = vmatprep.subr.mxu0 0.0
          %336 = vmatpush1.msra.mxu0 0.0
          %337 = vmatprep.subr.mxu0 0.0
          %338 = vmatpush1.msra.mxu0 0.0
          %339 = vmatprep.subr.mxu0 0.0
          %340 = vmatpush1.msra.mxu0 0.0
          %341 = vmatprep.subr.mxu0 0.0
          %342 = vmatpush1.msra.mxu0 0.0
          %343 = vmatprep.subr.mxu0 0.0
          %344 = vmatpush1.msra.mxu0 0.0
          %345 = vmatprep.subr.mxu0 0.0
          %346 = vmatpush1.msra.mxu0 0.0
          %347 = vmatprep.subr.mxu0 0.0
          %348 = vmatpush1.msra.mxu0 0.0
          %349 = vmatprep.subr.mxu0 0.0
          %350 = vmatpush1.msra.mxu0 0.0
          %351 = vmatprep.subr.mxu0 0.0
          %352 = vmatpush1.msra.mxu0 0.0
          %353 = vmatprep.subr.mxu0 0.0
          %354 = vmatpush1.msra.mxu0 0.0
          %355 = vmatprep.subr.mxu0 0.0
          %356 = vmatpush1.msra.mxu0 0.0
          %357 = vmatprep.subr.mxu0 0.0
          %358 = vmatpush1.msra.mxu0 0.0
          %359 = vmatprep.subr.mxu0 0.0
          %360 = vmatpush1.msra.mxu0 0.0
          %361 = vmatprep.subr.mxu0 0.0
          %362 = vmatpush1.msra.mxu0 0.0
          %363 = vmatprep.subr.mxu0 0.0
          %364 = vmatpush1.msra.mxu0 0.0
          %365 = vmatprep.subr.mxu0 0.0
          %366 = vmatpush1.msra.mxu0 0.0
          %367 = vmatprep.subr.mxu0 0.0
          %368 = vmatpush1.msra.mxu0 0.0
          %369 = vmatprep.subr.mxu0 0.0
          %370 = vmatpush1.msra.mxu0 0.0
          %371 = vmatprep.subr.mxu0 0.0
          %372 = vmatpush1.msra.mxu0 0.0
          %373 = vmatprep.subr.mxu0 0.0
          %374 = vmatpush1.msra.mxu0 0.0
          %375 = vmatprep.subr.mxu0 0.0
          %376 = vmatpush1.msra.mxu0 0.0
          %377 = vmatprep.mubr.f32.mxu0 0.0
          %378 = vmatmul.mubr.f32.gmra.mrb[0].mxu0 %v307
          %v379 = vpop.f32.mrb[0].mxu0
          %v380 = vadd.f32 0.0, %v379
          %v381 = vpop.f32.mrb[0].mxu0
          %382 = vdwg.mxu0
          %383 = vst [vmem:[%s197] sm:$0xff] %v380
        $region40: #{tpu_custom_call.1} parent=31 // pred_fallthru
          _
        %s384 = sand.u32 %s112, 1
        %s385 = scalar_lea.sflag [#allocation4], %s384
        %s386 = sand.u32 %s112, 1
        %s387 = smul.addr %s386, 8
        %s388 = scalar_lea.vmem [#allocation3], %s387
        // Predicated region
        $region41: #{tpu_custom_call.1} parent=31 // pred_check
          %p389 = pneg %p122
        $region42: #{tpu_custom_call.1} parent=31 // pred_check_branch
          %391 = sbr.rel (%p389) target = $region44
        $region43: #{tpu_custom_call.1} parent=31 // pred_region
          %s393 = ssub.s32 128, 128
          %394 = vsyncadd %s385, %s393
          %s395 = smul.addr %s21, 128
          %s396 = scalar_lea.hbm %s3, %s395
          %s398 = sshll.u32 %s388, 4
          %s399 = int_to_ptr.vmem [resolvable:$true] %s398
          %401 = dma.vmem_to_hbm [thread:$0]  %s399, 128, %s396, %s385
        $region44: #{tpu_custom_call.1} parent=31 // pred_fallthru
          _
      $region32: #{tpu_custom_call.1} parent=5 // pred_fallthru
        _
      %p402 = scmp.le.s32.totalorder 2, %s12
      // Predicated region
      $region45: #{tpu_custom_call.1} parent=5 // pred_check
        %p403 = pneg %p402
      $region46: #{tpu_custom_call.1} parent=5 // pred_check_branch
        %405 = sbr.rel (%p403) target = $region48
      $region47: #{tpu_custom_call.1} parent=5 // pred_region
        %s406 = ssub.s32 %s12, 2
        // Predicated region
        $region49: #{tpu_custom_call.1} parent=47 // pred_check
          %p407 = pneg %p128
        $region50: #{tpu_custom_call.1} parent=47 // pred_check_branch
          %409 = sbr.rel (%p407) target = $region52
        $region51: #{tpu_custom_call.1} parent=47 // pred_region
          %s410 = sand.u32 %s113, 1
          %s411 = scalar_lea.sflag [#allocation4], %s410
          %s412 = sand.u32 %s113, 1
          %s413 = smul.addr %s412, 8
          %s414 = scalar_lea.vmem [#allocation3], %s413
          %415 = dma.done %s411, 128
        $region52: #{tpu_custom_call.1} parent=47 // pred_fallthru
          _
      $region48: #{tpu_custom_call.1} parent=5 // pred_fallthru
        _
    $region6: #{tpu_custom_call.1} parent=1 // loop_footer
      %s16 = sadd.s32 1, %s12
    $region7: #{tpu_custom_call.1} parent=1 // loop_footer_branch
      %11 = sbr.rel target = $region3
    $region8: #{tpu_custom_call.1} parent=1 // loop_exit
      _
    %416 = vsyncpa [#allocation4], 1
    %s417 = scalar_lea.sflag [#allocation4], 1
    %418 = vsyncpa %s417, 1

// kernel: tpu_custom_call.1
$region0: #{tpu_custom_call.1}
  #allocation0 [shape = 'u32[]', space=smem, size = 0x4, offset = 0x4, fixed_abs, tag = 'smem constant byte address 0x4 - core index']
  #allocation1 [shape = 'u32[144,128]{1,0:T(1,128)}', space=vmem, size = 0x12000, scoped, tag = 'internal scratch']
  #allocation2 [shape = 'f32[8,4]{1,0:T(8,128)}', space=vmem, size = 0x1000, scoped, tag = 'scratch operand']
  %s0 = inlined_call_operand.vmem [shape: f32[16,32], index: 0, kind: input, shape index: {}]
  %s1 = inlined_call_operand.vmem [shape: f32[32,4], index: 1, kind: input, shape index: {}]
  %s2 = inlined_call_operand.vmem [shape: f32[4,128], index: 2, kind: input, shape index: {}]
  %s3 = inlined_call_operand.hbm [shape: f32[16,128], index: 3, kind: output, shape index: {}]
  %s4 = sld [smem:[#allocation0]]
  $region53: #{tpu_custom_call.1} parent=0
    _
  %s6 = ssub.s32 1, %s4
  %s7 = scalar_select 0, %s6, %s4
  $region1: #{tpu_custom_call.1} parent=0
    #allocation3 [shape = 'u8[8192]{0}', space=vmem, size = 0x2000, scoped, tag = 'output window, operand 0']
    #allocation4 [shape = 's32[2]{0}', space=sflag, size = 0x8, scoped, tag = 'scoped memory for tpu_custom_call.1']
    %8 = vsyncpa [#allocation4], 0
    %s9 = scalar_lea.sflag [#allocation4], 1
    %10 = vsyncpa %s9, 0
    loop: start=0, step=1, limit=4
    $region2: #{tpu_custom_call.1} parent=1 // loop_pre_header
      _
    $region3: #{tpu_custom_call.1} parent=1 // loop_header
      %s12 = sphi 0, %s16
      %p13 = scmp.ge.s32.totalorder %s12, 4
      %s19 = sphi 0, %s31
      %s20 = sphi 0, %s27
      %s21 = sphi 0, %s19
      %s22 = sphi 0, %s20
      %s23 = sphi 0, %s21
      %s24 = sphi 0, %s22
      %s36 = sphi 0, %s38
      %s39 = sphi 0, %s36
      %s40 = sphi 0, %s39
      %s56 = sphi 0, %s40
      %s62 = sphi 0, %s64
      %s65 = sphi 0, %s62
      %s66 = sphi 0, %s65
      %s82 = sphi 0, %s66
      %s86 = sphi 0, %s86
      %s88 = sphi 0, %s86
      %s89 = sphi 0, %s88
      %s103 = sphi 0, %s89
      %s109 = sphi 0, %s111
      %s112 = sphi 0, %s109
      %s113 = sphi 0, %s112
      %s129 = sphi 0, %s113
    $region4: #{tpu_custom_call.1} parent=1 // loop_header_branch
      %15 = sbr.rel (%p13) target = $region8
    $region5: #{tpu_custom_call.1} parent=1 // loop_body
      %s17 = ssub.s32 %s12, 1
      %s18 = ssub.s32 %s12, 2
      %s25 = sadd.s32 1, %s20
      %p26 = scmp.ge.s32.totalorder %s25, 1
      %s27 = scalar_select %p26, 0, %s25
      %s28 = sadd.s32 1, %s19
      %s29 = scalar_select %p26, %s28, %s19
      %p30 = scmp.ge.s32.totalorder %s29, 2
      %s31 = scalar_select %p30, 0, %s29
      %s32 = ssub.s32 %s19, %s31
      %s33 = ssub.s32 %s20, %s27
      %s34 = sor.u32 %s32, %s33
      %p35 = scmp.eq.s32.totalorder %s34, 0
      %s37 = sadd.s32 %s36, 1
      %s38 = scalar_select %p35, %s36, %s37
      %p41 = pneg %p35
      %p42 = scmp.eq.s32.totalorder %s12, 1
      %p43 = por %p41, %p42
      %p44 = scmp.ne.s32.totalorder %s36, %s39
      %p45 = scmp.eq.s32.totalorder %s12, 0
      %p46 = por %p44, %p45
      %p47 = scmp.ne.s32.totalorder %s36, %s39
      %p48 = scmp.eq.s32.totalorder %s17, 1
      %p49 = por %p47, %p48
      %p50 = scmp.ne.s32.totalorder %s39, %s40
      %p51 = scmp.eq.s32.totalorder %s17, 0
      %p52 = por %p50, %p51
      %p53 = scmp.ne.s32.totalorder %s39, %s40
      %p54 = scmp.eq.s32.totalorder %s18, 1
      %p55 = por %p53, %p54
      %p57 = scmp.ne.s32.totalorder %s40, %s56
      %p58 = scmp.eq.s32.totalorder %s18, 0
      %p59 = por %p57, %p58
      %s60 = ssub.s32 %s20, %s27
      %p61 = scmp.eq.s32.totalorder %s60, 0
      %s63 = sadd.s32 %s62, 1
      %s64 = scalar_select %p61, %s62, %s63
      %p67 = pneg %p61
      %p68 = scmp.eq.s32.totalorder %s12, 1
      %p69 = por %p67, %p68
      %p70 = scmp.ne.s32.totalorder %s62, %s65
      %p71 = scmp.eq.s32.totalorder %s12, 0
      %p72 = por %p70, %p71
      %p73 = scmp.ne.s32.totalorder %s62, %s65
      %p74 = scmp.eq.s32.totalorder %s17, 1
      %p75 = por %p73, %p74
      %p76 = scmp.ne.s32.totalorder %s65, %s66
      %p77 = scmp.eq.s32.totalorder %s17, 0
      %p78 = por %p76, %p77
      %p79 = scmp.ne.s32.totalorder %s65, %s66
      %p80 = scmp.eq.s32.totalorder %s18, 1
      %p81 = por %p79, %p80
      %p83 = scmp.ne.s32.totalorder %s66, %s82
      %p84 = scmp.eq.s32.totalorder %s18, 0
      %p85 = por %p83, %p84
      %s87 = sadd.s32 %s86, 1
      %p90 = scmp.eq.s32.totalorder %s12, 1
      %p91 = scmp.ne.s32.totalorder %s86, %s88
      %p92 = scmp.eq.s32.totalorder %s12, 0
      %p93 = por %p91, %p92
      %p94 = scmp.ne.s32.totalorder %s86, %s88
      %p95 = scmp.eq.s32.totalorder %s17, 1
      %p96 = por %p94, %p95
      %p97 = scmp.ne.s32.totalorder %s88, %s89
      %p98 = scmp.eq.s32.totalorder %s17, 0
      %p99 = por %p97, %p98
      %p100 = scmp.ne.s32.totalorder %s88, %s89
      %p101 = scmp.eq.s32.totalorder %s18, 1
      %p102 = por %p100, %p101
      %p104 = scmp.ne.s32.totalorder %s89, %s103
      %p105 = scmp.eq.s32.totalorder %s18, 0
      %p106 = por %p104, %p105
      %s107 = ssub.s32 %s19, %s31
      %p108 = scmp.eq.s32.totalorder %s107, 0
      %s110 = sadd.s32 %s109, 1
      %s111 = scalar_select %p108, %s109, %s110
      %p114 = pneg %p108
      %p115 = scmp.eq.s32.totalorder %s12, 1
      %p116 = por %p114, %p115
      %p117 = scmp.ne.s32.totalorder %s109, %s112
      %p118 = scmp.eq.s32.totalorder %s12, 0
      %p119 = por %p117, %p118
      %p120 = scmp.ne.s32.totalorder %s109, %s112
      %p121 = scmp.eq.s32.totalorder %s17, 1
      %p122 = por %p120, %p121
      %p123 = scmp.ne.s32.totalorder %s112, %s113
      %p124 = scmp.eq.s32.totalorder %s17, 0
      %p125 = por %p123, %p124
      %p126 = scmp.ne.s32.totalorder %s112, %s113
      %p127 = scmp.eq.s32.totalorder %s18, 1
      %p128 = por %p126, %p127
      %p130 = scmp.ne.s32.totalorder %s113, %s129
      %p131 = scmp.eq.s32.totalorder %s18, 0
      %p132 = por %p130, %p131
      %p133 = scmp.le.s32.totalorder 1, %s12
      %p134 = scmp.lt.s32.totalorder %s12, 3
      %p135 = pnand %p133, %p134
      %p136 = pneg %p135
      // Predicated region
      $region9: #{tpu_custom_call.1} parent=5 // pred_check
        _
      $region10: #{tpu_custom_call.1} parent=5 // pred_check_branch
        %138 = sbr.rel (%p135) target = $region12
      $region11: #{tpu_custom_call.1} parent=5 // pred_region
        %s139 = ssub.s32 %s12, 1
        // Predicated region
        $region13: #{tpu_custom_call.1} parent=11 // pred_check
          %p140 = pneg %p78
        $region14: #{tpu_custom_call.1} parent=11 // pred_check_branch
          %142 = sbr.rel (%p140) target = $region16
        $region15: #{tpu_custom_call.1} parent=11 // pred_region
          %s143 = smul.u32 4, %s22
          %p144 = scmp.lt.s32.totalorder %s143, 3
          %s145 = scalar_select %p144, %s143, 3
          %s146 = smul.addr %s145, 8
          %s147 = scalar_lea.vmem %s1, %s146
          %s148 = smul.u32 4, %s22
        $region16: #{tpu_custom_call.1} parent=11 // pred_fallthru
          _
        // Predicated region
        $region17: #{tpu_custom_call.1} parent=11 // pred_check
          %p149 = pneg %p99
        $region18: #{tpu_custom_call.1} parent=11 // pred_check_branch
          %151 = sbr.rel (%p149) target = $region20
        $region19: #{tpu_custom_call.1} parent=11 // pred_region
          _
        $region20: #{tpu_custom_call.1} parent=11 // pred_fallthru
          _
      $region12: #{tpu_custom_call.1} parent=5 // pred_fallthru
        _
      %p152 = scmp.lt.s32.totalorder %s12, 2
      // Predicated region
      $region21: #{tpu_custom_call.1} parent=5 // pred_check
        %p153 = pneg %p152
      $region22: #{tpu_custom_call.1} parent=5 // pred_check_branch
        %155 = sbr.rel (%p153) target = $region24
      $region23: #{tpu_custom_call.1} parent=5 // pred_region
        // Predicated region
        $region25: #{tpu_custom_call.1} parent=23 // pred_check
          %p156 = pneg %p46
        $region26: #{tpu_custom_call.1} parent=23 // pred_check_branch
          %158 = sbr.rel (%p156) target = $region28
        $region27: #{tpu_custom_call.1} parent=23 // pred_region
          %p159 = scmp.lt.s32.totalorder %s19, 1
          %s160 = scalar_select %p159, %s19, 1
          %p161 = scmp.lt.s32.totalorder %s20, 0
          %s162 = scalar_select %p161, %s20, 0
          %s163 = sadd.s32 %s162, %s160
          %s164 = smul.addr %s163, 8
          %s165 = scalar_lea.vmem %s0, %s164
        $region28: #{tpu_custom_call.1} parent=23 // pred_fallthru
          _
      $region24: #{tpu_custom_call.1} parent=5 // pred_fallthru
        _
      %p166 = scmp.le.s32.totalorder 1, %s12
      %p167 = scmp.lt.s32.totalorder %s12, 3
      %p168 = pnand %p166, %p167
      %p169 = pneg %p168
      // Predicated region
      $region29: #{tpu_custom_call.1} parent=5 // pred_check
        _
      $region30: #{tpu_custom_call.1} parent=5 // pred_check_branch
        %171 = sbr.rel (%p168) target = $region32
      $region31: #{tpu_custom_call.1} parent=5 // pred_region
        %s172 = ssub.s32 %s12, 1
        %p173 = scmp.lt.s32.totalorder %s21, 1
        %s174 = scalar_select %p173, %s21, 1
        %p175 = scmp.lt.s32.totalorder %s22, 0
        %s176 = scalar_select %p175, %s22, 0
        %s177 = sadd.s32 %s176, %s174
        %s178 = smul.addr %s177, 8
        %s179 = scalar_lea.vmem %s0, %s178
        %p180 = pneg %p52
        %p181 = pneg %p49
        %s182 = smul.u32 4, %s22
        %p183 = scmp.lt.s32.totalorder %s182, 3
        %s184 = scalar_select %p183, %s182, 3
        %s185 = smul.addr %s184, 8
        %s186 = scalar_lea.vmem %s1, %s185
        %p187 = pneg %p78
        %p188 = pneg %p75
        %p189 = pneg %p99
        %p190 = pneg %p96
        %p191 = pneg %p125
        %p192 = pneg %p122
        %s193 = sand.u32 %s112, 1
        %s194 = scalar_lea.sflag [#allocation4], %s193
        %s195 = sand.u32 %s112, 1
        %s196 = smul.addr %s195, 8
        %s197 = scalar_lea.vmem [#allocation3], %s196
        %p198 = scmp.lt.s32.totalorder %s21, 1
        %s199 = scalar_select %p198, %s21, 1
        %p200 = scmp.lt.s32.totalorder %s22, 0
        %s201 = scalar_select %p200, %s22, 0
        %s202 = sadd.s32 %s201, %s199
        %s203 = smul.addr %s202, 8
        %s204 = scalar_lea.vmem %s0, %s203
        %s205 = smul.u32 4, %s22
        %p206 = scmp.lt.s32.totalorder %s205, 3
        %s207 = scalar_select %p206, %s205, 3
        %s208 = smul.addr %s207, 8
        %s209 = scalar_lea.vmem %s1, %s208
        %s210 = smul.u32 4, %s22
        %p211 = scmp.eq.s32.totalorder %s22, 0
        // Predicated region
        $region33: #{tpu_custom_call.1} parent=31 // pred_check
          %p212 = pneg %p211
        $region34: #{tpu_custom_call.1} parent=31 // pred_check_branch
          %214 = sbr.rel (%p212) target = $region36
        $region35: #{tpu_custom_call.1} parent=31 // pred_region
          %vm215 = vcmask 31744
          %216 = vst.msk [vmem:[#allocation2] sm:$0xff] %vm215, 0.0
        $region36: #{tpu_custom_call.1} parent=31 // pred_fallthru
          _
        %v217 = vld [vmem:[#allocation2] sm:$0xff]
        %v218 = vld [vmem:[%s204] sm:$0xff]
        %v219 = vld [vmem:[%s209] sm:$0xff]
        %v220 = vld [vmem:[%s209 + $0x8] sm:$0xff]
        %v221 = vld [vmem:[%s209 + $0x10] sm:$0xff]
        %v222 = vld [vmem:[%s209 + $0x18] sm:$0xff]
        %vm223 = vcmask 261120
        %v225 = vsel %vm223, %v218, 0
        %227 = vmatprep.subr.mxu0 0.0
        %228 = vmatpush1.msra.mxu0 %v219
        %229 = vmatprep.subr.mxu0 0.0
        %230 = vmatpush1.msra.mxu0 %v220
        %231 = vmatprep.subr.mxu0 0.0
        %232 = vmatpush1.msra.mxu0 %v221
        %233 = vmatprep.subr.mxu0 0.0
        %234 = vmatpush1.msra.mxu0 %v222
        %235 = vmatprep.subr.mxu0 0.0
        %236 = vmatpush1.msra.mxu0 0.0
        %237 = vmatprep.subr.mxu0 0.0
        %238 = vmatpush1.msra.mxu0 0.0
        %239 = vmatprep.subr.mxu0 0.0
        %240 = vmatpush1.msra.mxu0 0.0
        %241 = vmatprep.subr.mxu0 0.0
        %242 = vmatpush1.msra.mxu0 0.0
        %243 = vmatprep.subr.mxu0 0.0
        %244 = vmatpush1.msra.mxu0 0.0
        %245 = vmatprep.subr.mxu0 0.0
        %246 = vmatpush1.msra.mxu0 0.0
        %247 = vmatprep.subr.mxu0 0.0
        %248 = vmatpush1.msra.mxu0 0.0
        %249 = vmatprep.subr.mxu0 0.0
        %250 = vmatpush1.msra.mxu0 0.0
        %251 = vmatprep.subr.mxu0 0.0
        %252 = vmatpush1.msra.mxu0 0.0
        %253 = vmatprep.subr.mxu0 0.0
        %254 = vmatpush1.msra.mxu0 0.0
        %255 = vmatprep.subr.mxu0 0.0
        %256 = vmatpush1.msra.mxu0 0.0
        %257 = vmatprep.subr.mxu0 0.0
        %258 = vmatpush1.msra.mxu0 0.0
        %259 = vmatprep.subr.mxu0 0.0
        %260 = vmatpush1.msra.mxu0 0.0
        %261 = vmatprep.subr.mxu0 0.0
        %262 = vmatpush1.msra.mxu0 0.0
        %263 = vmatprep.subr.mxu0 0.0
        %264 = vmatpush1.msra.mxu0 0.0
        %265 = vmatprep.subr.mxu0 0.0
        %266 = vmatpush1.msra.mxu0 0.0
        %267 = vmatprep.subr.mxu0 0.0
        %268 = vmatpush1.msra.mxu0 0.0
        %269 = vmatprep.subr.mxu0 0.0
        %270 = vmatpush1.msra.mxu0 0.0
        %271 = vmatprep.subr.mxu0 0.0
        %272 = vmatpush1.msra.mxu0 0.0
        %273 = vmatprep.subr.mxu0 0.0
        %274 = vmatpush1.msra.mxu0 0.0
        %275 = vmatprep.subr.mxu0 0.0
        %276 = vmatpush1.msra.mxu0 0.0
        %277 = vmatprep.subr.mxu0 0.0
        %278 = vmatpush1.msra.mxu0 0.0
        %279 = vmatprep.subr.mxu0 0.0
        %280 = vmatpush1.msra.mxu0 0.0
        %281 = vmatprep.subr.mxu0 0.0
        %282 = vmatpush1.msra.mxu0 0.0
        %283 = vmatprep.subr.mxu0 0.0
        %284 = vmatpush1.msra.mxu0 0.0
        %285 = vmatprep.subr.mxu0 0.0
        %286 = vmatpush1.msra.mxu0 0.0
        %287 = vmatprep.subr.mxu0 0.0
        %288 = vmatpush1.msra.mxu0 0.0
        %289 = vmatprep.subr.mxu0 0.0
        %290 = vmatpush1.msra.mxu0 0.0
        %291 = vmatprep.mubr.f32.mxu0 0.0
        %292 = vmatmul.mubr.f32.gmra.mrb[0].mxu0 %v225
        %v293 = vpop.f32.mrb[0].mxu0
        %v294 = vadd.f32 0.0, %v293
        %v295 = vpop.f32.mrb[0].mxu0
        %296 = vdwg.mxu0
        %v297 = vadd.f32 %v217, %v294
        %vm298 = vcmask 31744
        %299 = vst.msk [vmem:[#allocation2] sm:$0xff] %vm298, %v297
        // Predicated region
        $region37: #{tpu_custom_call.1} parent=31 // pred_check
          %p300 = pneg %p211
        $region38: #{tpu_custom_call.1} parent=31 // pred_check_branch
          %302 = sbr.rel (%p300) target = $region40
        $region39: #{tpu_custom_call.1} parent=31 // pred_region
          %v303 = vld [vmem:[#allocation2] sm:$0xff]
          %v304 = vmul.f32 %v303, 8.0
          %v305 = vld [vmem:[%s2] sm:$0xf]
          %v307 = vsel %vm298, %v304, 0
          %vm309 = vcmask 1043456
          %v311 = vsel %vm309, %v305, 0
          %313 = vmatprep.subr.mxu0 0.0
          %314 = vmatpush1.msra.mxu0 %v311
          %315 = vmatprep.subr.mxu0 0.0
          %316 = vmatpush1.msra.mxu0 0.0
          %317 = vmatprep.subr.mxu0 0.0
          %318 = vmatpush1.msra.mxu0 0.0
          %319 = vmatprep.subr.mxu0 0.0
          %320 = vmatpush1.msra.mxu0 0.0
          %321 = vmatprep.subr.mxu0 0.0
          %322 = vmatpush1.msra.mxu0 0.0
          %323 = vmatprep.subr.mxu0 0.0
          %324 = vmatpush1.msra.mxu0 0.0
          %325 = vmatprep.subr.mxu0 0.0
          %326 = vmatpush1.msra.mxu0 0.0
          %327 = vmatprep.subr.mxu0 0.0
          %328 = vmatpush1.msra.mxu0 0.0
          %329 = vmatprep.subr.mxu0 0.0
          %330 = vmatpush1.msra.mxu0 0.0
          %331 = vmatprep.subr.mxu0 0.0
          %332 = vmatpush1.msra.mxu0 0.0
          %333 = vmatprep.subr.mxu0 0.0
          %334 = vmatpush1.msra.mxu0 0.0
          %335 = vmatprep.subr.mxu0 0.0
          %336 = vmatpush1.msra.mxu0 0.0
          %337 = vmatprep.subr.mxu0 0.0
          %338 = vmatpush1.msra.mxu0 0.0
          %339 = vmatprep.subr.mxu0 0.0
          %340 = vmatpush1.msra.mxu0 0.0
          %341 = vmatprep.subr.mxu0 0.0
          %342 = vmatpush1.msra.mxu0 0.0
          %343 = vmatprep.subr.mxu0 0.0
          %344 = vmatpush1.msra.mxu0 0.0
          %345 = vmatprep.subr.mxu0 0.0
          %346 = vmatpush1.msra.mxu0 0.0
          %347 = vmatprep.subr.mxu0 0.0
          %348 = vmatpush1.msra.mxu0 0.0
          %349 = vmatprep.subr.mxu0 0.0
          %350 = vmatpush1.msra.mxu0 0.0
          %351 = vmatprep.subr.mxu0 0.0
          %352 = vmatpush1.msra.mxu0 0.0
          %353 = vmatprep.subr.mxu0 0.0
          %354 = vmatpush1.msra.mxu0 0.0
          %355 = vmatprep.subr.mxu0 0.0
          %356 = vmatpush1.msra.mxu0 0.0
          %357 = vmatprep.subr.mxu0 0.0
          %358 = vmatpush1.msra.mxu0 0.0
          %359 = vmatprep.subr.mxu0 0.0
          %360 = vmatpush1.msra.mxu0 0.0
          %361 = vmatprep.subr.mxu0 0.0
          %362 = vmatpush1.msra.mxu0 0.0
          %363 = vmatprep.subr.mxu0 0.0
          %364 = vmatpush1.msra.mxu0 0.0
          %365 = vmatprep.subr.mxu0 0.0
          %366 = vmatpush1.msra.mxu0 0.0
          %367 = vmatprep.subr.mxu0 0.0
          %368 = vmatpush1.msra.mxu0 0.0
          %369 = vmatprep.subr.mxu0 0.0
          %370 = vmatpush1.msra.mxu0 0.0
          %371 = vmatprep.subr.mxu0 0.0
          %372 = vmatpush1.msra.mxu0 0.0
          %373 = vmatprep.subr.mxu0 0.0
          %374 = vmatpush1.msra.mxu0 0.0
          %375 = vmatprep.subr.mxu0 0.0
          %376 = vmatpush1.msra.mxu0 0.0
          %377 = vmatprep.mubr.f32.mxu0 0.0
          %378 = vmatmul.mubr.f32.gmra.mrb[0].mxu0 %v307
          %v379 = vpop.f32.mrb[0].mxu0
          %v380 = vadd.f32 0.0, %v379
          %v381 = vpop.f32.mrb[0].mxu0
          %382 = vdwg.mxu0
          %383 = vst [vmem:[%s197] sm:$0xff] %v380
        $region40: #{tpu_custom_call.1} parent=31 // pred_fallthru
          _
        %s384 = sand.u32 %s112, 1
        %s385 = scalar_lea.sflag [#allocation4], %s384
        %s386 = sand.u32 %s112, 1
        %s387 = smul.addr %s386, 8
        %s388 = scalar_lea.vmem [#allocation3], %s387
        // Predicated region
        $region41: #{tpu_custom_call.1} parent=31 // pred_check
          %p389 = pneg %p122
        $region42: #{tpu_custom_call.1} parent=31 // pred_check_branch
          %391 = sbr.rel (%p389) target = $region44
        $region43: #{tpu_custom_call.1} parent=31 // pred_region
          %s393 = ssub.s32 128, 128
          %394 = vsyncadd %s385, %s393
          %s395 = smul.addr %s21, 128
          %s396 = scalar_lea.hbm %s3, %s395
          %s398 = sshll.u32 %s388, 4
          %s399 = int_to_ptr.vmem [resolvable:$true] %s398
          %401 = dma.vmem_to_hbm [thread:$0]  %s399, 128, %s396, %s385
        $region44: #{tpu_custom_call.1} parent=31 // pred_fallthru
          _
      $region32: #{tpu_custom_call.1} parent=5 // pred_fallthru
        _
      %p402 = scmp.le.s32.totalorder 2, %s12
      // Predicated region
      $region45: #{tpu_custom_call.1} parent=5 // pred_check
        %p403 = pneg %p402
      $region46: #{tpu_custom_call.1} parent=5 // pred_check_branch
        %405 = sbr.rel (%p403) target = $region48
      $region47: #{tpu_custom_call.1} parent=5 // pred_region
        %s406 = ssub.s32 %s12, 2
        // Predicated region
        $region49: #{tpu_custom_call.1} parent=47 // pred_check
          %p407 = pneg %p128
        $region50: #{tpu_custom_call.1} parent=47 // pred_check_branch
          %409 = sbr.rel (%p407) target = $region52
        $region51: #{tpu_custom_call.1} parent=47 // pred_region
          %s410 = sand.u32 %s113, 1
          %s411 = scalar_lea.sflag [#allocation4], %s410
          %s412 = sand.u32 %s113, 1
          %s413 = smul.addr %s412, 8
          %s414 = scalar_lea.vmem [#allocation3], %s413
          %415 = dma.done %s411, 128
        $region52: #{tpu_custom_call.1} parent=47 // pred_fallthru
          _
      $region48: #{tpu_custom_call.1} parent=5 // pred_fallthru
        _
    $region6: #{tpu_custom_call.1} parent=1 // loop_footer
      %s16 = sadd.s32 1, %s12
    $region7: #{tpu_custom_call.1} parent=1 // loop_footer_branch
      %11 = sbr.rel target = $region3
    $region8: #{tpu_custom_call.1} parent=1 // loop_exit
      _
    %416 = vsyncpa [#allocation4], 1
    %s417 = scalar_lea.sflag [#allocation4], 1
    %418 = vsyncpa %s417, 1

</llo_original>
